<compile_context>
chip_gen: v6e
topology: v6e:2x2x1
jax: 0.10.0
libtpu: 0.0.40
codegen_flags: <defaults>
</compile_context>

<pallas_src>
import functools

import numpy as np
import jax
import jax.numpy as jnp
from jax import lax
from jax.experimental import pallas as pl
from jax.experimental.pallas import tpu as pltpu


# ----------------------------------------------------------------------------
# Episode-invariant constants (computed once on host, passed as resident inputs)
# ----------------------------------------------------------------------------
def _episode_constants(eb, n_way, shot_k, query_k):
    """Constants for a block of `eb` episodes laid out row-major.

    Returns (all float32):
      avg  (eb*n_way, eb*n_rows): block-diagonal shot-averaging matrix (1/shot_k).
      cls  (eb*n_way, eb*n_rows): class index of the proto row if same episode,
                                  sentinel n_way otherwise.
      tcls (1, eb*n_rows)       : true class of each episode row.
      sel  (eb*n_rows, 128)     : query-gated episode selector (column e picks
                                  the query rows of local episode e), lane-padded
                                  to 128 so the per-episode reduction is one
                                  lane-dense MXU dot and the output store is
                                  unmasked.
    """
    assert eb <= 128, "episodes_per_block must fit in one 128-lane output tile"
    spq = shot_k + query_k
    n_rows = n_way * spq
    nb = eb * n_rows
    wb = eb * n_way

    col = np.arange(nb)
    col_ep = col // n_rows
    col_in = col % n_rows
    col_cls = col_in // spq
    col_q = (col_in % spq) >= shot_k

    row = np.arange(wb)
    row_ep = row // n_way
    row_cls = row % n_way

    same_ep = row_ep[:, None] == col_ep[None, :]
    is_shot = same_ep & (row_cls[:, None] == col_cls[None, :]) & (~col_q)[None, :]

    avg = is_shot.astype(np.float32) / np.float32(shot_k)
    cls = np.where(same_ep, row_cls[:, None], n_way).astype(np.float32)
    tcls = col_cls.astype(np.float32)[None, :]
    sel = np.zeros((nb, 128), np.float32)
    sel[col, col_ep] = col_q.astype(np.float32)

    return jnp.asarray(avg), jnp.asarray(cls), jnp.asarray(tcls), jnp.asarray(sel)


# ----------------------------------------------------------------------------
# Fused per-block compute: encoder -> prototypes -> distances -> log_softmax ->
# NLL loss + argmax accuracy, class axis on sublanes / row axis on lanes.
# ----------------------------------------------------------------------------
def _episode_block_compute(x, w, b, avg, cls, tcls, sel, *, n_way, inv_m, use_bf16):
    f32 = jnp.float32

    # ---- encoder: flatten(NCHW) @ W + b, ReLU (MXU) --------------------------
    if use_bf16:
        x = x.astype(jnp.bfloat16)
        w = w.astype(jnp.bfloat16)
    feats = jnp.dot(x, w, preferred_element_type=f32) + b
    feats = jnp.maximum(feats, 0.0)                      # (Nb, Dp) f32, on-chip

    fmm = feats.astype(jnp.bfloat16) if use_bf16 else feats
    amm = avg.astype(jnp.bfloat16) if use_bf16 else avg

    # ---- class prototypes: block-diagonal shot-average as an MXU matmul ------
    proto = jnp.dot(amm, fmm, preferred_element_type=f32)        # (Wb, Dp)
    pmm = proto.astype(jnp.bfloat16) if use_bf16 else proto

    # ---- squared-euclidean logits (row-constant ||q||^2 dropped) -------------
    # cross[p, r] = proto_p . feats_r   (contract the feature axis, no transpose)
    cross = lax.dot_general(pmm, fmm,
                            dimension_numbers=(((1,), (1,)), ((), ())),
                            preferred_element_type=f32)          # (Wb, Nb)
    pn = jnp.sum(proto * proto, axis=1, keepdims=True)           # (Wb, 1)
    off_ep = jnp.where(cls < n_way, f32(0.0), f32(-1e30))        # mask other episodes
    logits = 2.0 * cross - pn + off_ep                           # (Wb, Nb)

    # ---- log_softmax over classes (sublane axis; rows stay lane-dense) -------
    mx = jnp.max(logits, axis=0, keepdims=True)                  # (1, Nb)
    z = logits - mx
    rel = z - jnp.log(jnp.sum(jnp.exp(z), axis=0, keepdims=True))  # (Wb, Nb)

    # ---- NLL gather (one-hot) and first-index argmax --------------------------
    onehot = (cls == tcls).astype(f32)                           # (Wb, Nb)
    gathered = jnp.sum(rel * onehot, axis=0, keepdims=True)      # (1, Nb)
    pred = jnp.min(jnp.where(logits == mx, cls, f32(n_way)),
                   axis=0, keepdims=True)                        # (1, Nb)
    correct = (pred == tcls).astype(f32)                         # (1, Nb)

    # ---- per-episode reduction via query-gated selector matmul ----------------
    stacked = jnp.concatenate([-inv_m * gathered, inv_m * correct], axis=0)  # (2, Nb)
    tile2 = jnp.dot(stacked, sel, preferred_element_type=f32)    # (2, 128)
    return jnp.concatenate([tile2, jnp.zeros((6, 128), f32)], axis=0)  # (8, 128)


def _proto_episode_kernel(x_ref, w_ref, b_ref, avg_ref, cls_ref, tcls_ref, sel_ref,
                          out_ref, *, n_way, inv_m, use_bf16):
    out_ref[0] = _episode_block_compute(
        x_ref[...], w_ref[...], b_ref[...], avg_ref[...], cls_ref[...],
        tcls_ref[...], sel_ref[...],
        n_way=n_way, inv_m=inv_m, use_bf16=use_bf16)


# ----------------------------------------------------------------------------
# Padding / cost helpers
# ----------------------------------------------------------------------------
def _pad_to_multiple(a, axis, mult):
    pad = (-a.shape[axis]) % mult
    if pad:
        widths = [(0, 0)] * a.ndim
        widths[axis] = (0, pad)
        a = jnp.pad(a, widths)
    return a


def _pad_inputs(x_flat, enc_w, enc_b):
    # zero feature columns / zero input columns change no distance, loss or acc.
    x_flat = _pad_to_multiple(x_flat.astype(jnp.float32), 1, 128)      # d_in -> 256
    enc_w = _pad_to_multiple(enc_w.astype(jnp.float32), 0, 128)
    enc_w = _pad_to_multiple(enc_w, 1, 128)                            # d_feat -> 128
    enc_b = _pad_to_multiple(enc_b.astype(jnp.float32).reshape(1, -1), 1, 128)
    return x_flat, enc_w, enc_b


def _cost_estimate(num_blocks, nb, wb, d_in_p, d_p, arrays, out_elems):
    flops = num_blocks * (2 * nb * d_in_p * d_p      # encoder
                          + 4 * wb * nb * d_p        # proto + cross
                          + 4 * nb * 128             # per-episode selector dot
                          + 12 * wb * nb)            # elementwise
    trans = num_blocks * (wb * nb + nb)              # exp + log
    nbytes = sum(int(a.size) * a.dtype.itemsize for a in arrays) + out_elems * 4
    return pl.CostEstimate(flops=int(flops), transcendentals=int(trans),
                           bytes_accessed=int(nbytes))


# ----------------------------------------------------------------------------
# Single-episode forward (faithful to protoPipe.forward): NO grid, whole-array
# VMEM BlockSpecs, one fused kernel invocation.
# ----------------------------------------------------------------------------
def proto_pipe_forward(task, n_way, shot_k, query_k, enc_w, enc_b,
                       use_bf16_matmul=False):
    spq = shot_k + query_k
    n_rows = n_way * spq
    assert task.shape[0] == n_rows
    x = task.reshape(n_rows, -1)
    x, w, b = _pad_inputs(x, enc_w, enc_b)
    d_in_p, d_p = w.shape
    avg, cls, tcls, sel = _episode_constants(1, n_way, shot_k, query_k)

    kern = functools.partial(_proto_episode_kernel, n_way=n_way,
                             inv_m=1.0 / float(n_way * query_k),
                             use_bf16=use_bf16_matmul)
    vmem = pltpu.MemorySpace.VMEM
    arrays = (x, w, b, avg, cls, tcls, sel)
    out = pl.pallas_call(
        kern,
        out_shape=jax.ShapeDtypeStruct((1, 8, 128), jnp.float32),
        in_specs=[pl.BlockSpec(memory_space=vmem) for _ in arrays],
        out_specs=pl.BlockSpec(memory_space=vmem),
        cost_estimate=_cost_estimate(1, n_rows, n_way, d_in_p, d_p, arrays, 8 * 128),
    )(*arrays)
    return out[0, 0, 0], out[0, 1, 0]


# ----------------------------------------------------------------------------
# Batched-episode forward: grid over episode blocks, weights + constants
# VMEM-resident across steps, lane-dense per-episode outputs, "parallel"
# episode axis (sharded across v7x's 2 TensorCores; no effect on v5e/v6e).
# ----------------------------------------------------------------------------
def proto_pipe_forward_batched(tasks, n_way, shot_k, query_k, enc_w, enc_b,
                               episodes_per_block=None, use_bf16_matmul=False):
    spq = shot_k + query_k
    n_rows = n_way * spq
    B = tasks.shape[0]
    assert tasks.shape[1] == n_rows

    if episodes_per_block is None:
        # 16 episodes x 80 rows = 1280 = 5*256 (v6e/v7x MXU M alignment);
        # 8 x 80 = 640 = 5*128 is enough on v5e.  Blocks this size use well
        # under v7x's 64 MiB VMEM (x block + feats + resident weights << 4 MiB).
        episodes_per_block = next(e for e in (16, 8, 4, 2, 1) if B % e == 0)
    eb = episodes_per_block
    assert B % eb == 0
    num_blocks = B // eb
    nb = eb * n_rows
    wb = eb * n_way
    # TODO(synk): pad the episode row count when n_way*(shot_k+query_k) is not a
    # multiple of 8 (not needed for the standard 5-shot/15-query setups).
    assert nb % 8 == 0

    x = tasks.reshape(B * n_rows, -1)
    x, w, b = _pad_inputs(x, enc_w, enc_b)
    d_in_p, d_p = w.shape
    avg, cls, tcls, sel = _episode_constants(eb, n_way, shot_k, query_k)

    kern = functools.partial(_proto_episode_kernel, n_way=n_way,
                             inv_m=1.0 / float(n_way * query_k),
                             use_bf16=use_bf16_matmul)
    arrays = (x, w, b, avg, cls, tcls, sel)
    out = pl.pallas_call(
        kern,
        out_shape=jax.ShapeDtypeStruct((num_blocks, 8, 128), jnp.float32),
        grid=(num_blocks,),
        in_specs=[
            pl.BlockSpec((nb, d_in_p), lambda i: (i, 0)),     # episode rows per block
            pl.BlockSpec((d_in_p, d_p), lambda i: (0, 0)),    # weights: resident
            pl.BlockSpec((1, d_p), lambda i: (0, 0)),         # bias: resident
            pl.BlockSpec((wb, nb), lambda i: (0, 0)),         # avg_mat: resident
            pl.BlockSpec((wb, nb), lambda i: (0, 0)),         # cls map: resident
            pl.BlockSpec((1, nb), lambda i: (0, 0)),          # true labels: resident
            pl.BlockSpec((nb, 128), lambda i: (0, 0)),        # episode selector: resident
        ],
        out_specs=pl.BlockSpec((1, 8, 128), lambda i: (i, 0, 0)),
        compiler_params=pltpu.CompilerParams(dimension_semantics=("parallel",)),
        cost_estimate=_cost_estimate(num_blocks, nb, wb, d_in_p, d_p, arrays,
                                     num_blocks * 8 * 128),
    )(*arrays)

    loss = out[:, 0, :eb].reshape(B)
    acc = out[:, 1, :eb].reshape(B)
    return loss, acc


# ----------------------------------------------------------------------------
# Pure-JAX reference (mirrors the PyTorch forward) for correctness checks
# ----------------------------------------------------------------------------
def reference_forward(task, n_way, shot_k, query_k, enc_w, enc_b):
    n = task.shape[0]
    x = task.reshape(n, -1).astype(jnp.float32)
    feats = jnp.maximum(x @ enc_w + enc_b, 0.0)
    d = feats.shape[-1]
    feats = feats.reshape(n_way, shot_k + query_k, d)
    proto = feats[:, :shot_k, :].mean(axis=1)                    # (n_way, D)
    qf = feats[:, shot_k:, :].reshape(n_way * query_k, d)        # (M, D)
    diff = proto[None, :, :] - qf[:, None, :]
    dis = jnp.sum(diff * diff, axis=2)                           # (M, n_way)
    rel = jax.nn.log_softmax(-dis, axis=1)
    labels = jnp.repeat(jnp.arange(n_way), query_k)
    loss = -jnp.mean(rel[jnp.arange(rel.shape[0]), labels])
    pred = jnp.argmax(rel, axis=1)
    acc = jnp.mean((pred == labels).astype(jnp.float32))
    return loss, acc


if __name__ == "__main__":
    n_way, shot_k, query_k = 4, 5, 15
    C, H, W = 3, 8, 8
    d_in, d_feat = C * H * W, 64
    n_rows = n_way * (shot_k + query_k)      # 80 rows per episode
    B = 16                                    # episodes for the batched path

    key = jax.random.PRNGKey(0)
    k_task, k_w, k_b = jax.random.split(key, 3)
    tasks = jax.random.normal(k_task, (B, n_rows, C, H, W), dtype=jnp.float32)
    enc_w = jax.random.normal(k_w, (d_in, d_feat), dtype=jnp.float32) * 0.05
    enc_b = jax.random.normal(k_b, (1, d_feat), dtype=jnp.float32) * 0.01

    m = n_way * query_k
    # FP reordering (2*q.p - ||p||^2 vs full expansion) can flip one near-tied
    # argmax -> allow at most one prediction of difference in accuracy.
    acc_tol = 1.0 / m + 1e-6

    # ---- single-episode path (module-faithful forward), no grid --------------
    loss1, acc1 = proto_pipe_forward(tasks[0], n_way, shot_k, query_k, enc_w, enc_b)
    loss1, acc1 = jax.block_until_ready((loss1, acc1))
    ref_l1, ref_a1 = reference_forward(tasks[0], n_way, shot_k, query_k, enc_w, enc_b)
    assert jnp.allclose(loss1, ref_l1, rtol=1e-3, atol=1e-3), (loss1, ref_l1)
    assert abs(float(acc1) - float(ref_a1)) <= acc_tol, (acc1, ref_a1)

    # ---- batched path: 16 episodes, 8 per block -> 2 grid steps ---------------
    lossB, accB = proto_pipe_forward_batched(tasks, n_way, shot_k, query_k,
                                             enc_w, enc_b, episodes_per_block=8)
    lossB, accB = jax.block_until_ready((lossB, accB))
    ref_lB, ref_aB = jax.vmap(
        lambda t: reference_forward(t, n_way, shot_k, query_k, enc_w, enc_b))(tasks)
    assert jnp.allclose(lossB, ref_lB, rtol=1e-3, atol=1e-3), (lossB, ref_lB)
    assert float(jnp.max(jnp.abs(accB - ref_aB))) <= acc_tol, (accB, ref_aB)

    print("KERNEL_OK")
</pallas_src>

<mosaic_0001>
module attributes {stable_mosaic.version = 11 : i64} {
  func.func @_proto_episode_kernel(%arg0: memref<80x256xf32, #tpu.memory_space<vmem>>, %arg1: memref<256x128xf32, #tpu.memory_space<vmem>>, %arg2: memref<1x128xf32, #tpu.memory_space<vmem>>, %arg3: memref<4x80xf32, #tpu.memory_space<vmem>>, %arg4: memref<4x80xf32, #tpu.memory_space<vmem>>, %arg5: memref<1x80xf32, #tpu.memory_space<vmem>>, %arg6: memref<80x128xf32, #tpu.memory_space<vmem>>, %arg7: memref<1x8x128xf32, #tpu.memory_space<vmem>>) attributes {dimension_semantics = [], scalar_prefetch = 0 : i64, scratch_operands = 0 : i64, tpu.core_type = #tpu.core_type<tc>} {
    %c0 = arith.constant 0 : index
    %c0_0 = arith.constant 0 : index
    %0 = vector.load %arg0[%c0, %c0_0] : memref<80x256xf32, #tpu.memory_space<vmem>>, vector<80x256xf32>
    %c0_1 = arith.constant 0 : index
    %c0_2 = arith.constant 0 : index
    %1 = vector.load %arg1[%c0_1, %c0_2] : memref<256x128xf32, #tpu.memory_space<vmem>>, vector<256x128xf32>
    %c0_3 = arith.constant 0 : index
    %c0_4 = arith.constant 0 : index
    %2 = vector.load %arg2[%c0_3, %c0_4] : memref<1x128xf32, #tpu.memory_space<vmem>>, vector<1x128xf32>
    %c0_5 = arith.constant 0 : index
    %c0_6 = arith.constant 0 : index
    %3 = vector.load %arg3[%c0_5, %c0_6] : memref<4x80xf32, #tpu.memory_space<vmem>>, vector<4x80xf32>
    %c0_7 = arith.constant 0 : index
    %c0_8 = arith.constant 0 : index
    %4 = vector.load %arg4[%c0_7, %c0_8] : memref<4x80xf32, #tpu.memory_space<vmem>>, vector<4x80xf32>
    %c0_9 = arith.constant 0 : index
    %c0_10 = arith.constant 0 : index
    %5 = vector.load %arg5[%c0_9, %c0_10] : memref<1x80xf32, #tpu.memory_space<vmem>>, vector<1x80xf32>
    %c0_11 = arith.constant 0 : index
    %c0_12 = arith.constant 0 : index
    %6 = vector.load %arg6[%c0_11, %c0_12] : memref<80x128xf32, #tpu.memory_space<vmem>>, vector<80x128xf32>
    %cst = arith.constant dense<0.000000e+00> : vector<80x128xf32>
    %7 = tpu.matmul %0, %1, %cst {dimension_numbers = #tpu.dot_dimension_numbers<[1], [0], [0], [1], [0, 0, 1, 1], [], []>} : vector<80x256xf32>, vector<256x128xf32>, vector<80x128xf32> -> vector<80x128xf32>
    %8 = vector.broadcast %2 : vector<1x128xf32> to vector<80x128xf32>
    %9 = arith.addf %7, %8 : vector<80x128xf32>
    %cst_13 = arith.constant 0.000000e+00 : f32
    %10 = vector.broadcast %cst_13 : f32 to vector<80x128xf32>
    %11 = arith.maximumf %9, %10 : vector<80x128xf32>
    %cst_14 = arith.constant dense<0.000000e+00> : vector<4x128xf32>
    %12 = tpu.matmul %3, %11, %cst_14 {dimension_numbers = #tpu.dot_dimension_numbers<[1], [0], [0], [1], [0, 0, 1, 1], [], []>} : vector<4x80xf32>, vector<80x128xf32>, vector<4x128xf32> -> vector<4x128xf32>
    %cst_15 = arith.constant dense<0.000000e+00> : vector<4x80xf32>
    %13 = tpu.matmul %12, %11, %cst_15 {dimension_numbers = #tpu.dot_dimension_numbers<[1], [1], [0], [0], [0, 0, 1, 0], [], []>} : vector<4x128xf32>, vector<80x128xf32>, vector<4x80xf32> -> vector<4x80xf32>
    %14 = arith.mulf %12, %12 : vector<4x128xf32>
    %cst_16 = arith.constant dense<0.000000e+00> : vector<4xf32>
    %15 = vector.multi_reduction <add>, %14, %cst_16 [1] : vector<4x128xf32> to vector<4xf32>
    %16 = vector.shape_cast %15 : vector<4xf32> to vector<4x1xf32>
    %cst_17 = arith.constant 4.000000e+00 : f32
    %17 = vector.broadcast %cst_17 : f32 to vector<4x80xf32>
    %18 = arith.cmpf olt, %4, %17 : vector<4x80xf32>
    %cst_18 = arith.constant 0.000000e+00 : f32
    %cst_19 = arith.constant -1.000000e+30 : f32
    %19 = vector.broadcast %cst_18 : f32 to vector<4x80xf32>
    %20 = vector.broadcast %cst_19 : f32 to vector<4x80xf32>
    %21 = arith.select %18, %19, %20 : vector<4x80xi1>, vector<4x80xf32>
    %cst_20 = arith.constant 2.000000e+00 : f32
    %22 = vector.broadcast %cst_20 : f32 to vector<4x80xf32>
    %23 = arith.mulf %22, %13 : vector<4x80xf32>
    %24 = vector.broadcast %16 : vector<4x1xf32> to vector<4x80xf32>
    %25 = arith.subf %23, %24 : vector<4x80xf32>
    %26 = arith.addf %25, %21 : vector<4x80xf32>
    %cst_21 = arith.constant dense<0xFF800000> : vector<80xf32>
    %27 = vector.multi_reduction <maximumf>, %26, %cst_21 [0] : vector<4x80xf32> to vector<80xf32>
    %28 = vector.shape_cast %27 : vector<80xf32> to vector<1x80xf32>
    %29 = vector.broadcast %28 : vector<1x80xf32> to vector<4x80xf32>
    %30 = arith.subf %26, %29 : vector<4x80xf32>
    %31 = math.exp %30 : vector<4x80xf32>
    %cst_22 = arith.constant dense<0.000000e+00> : vector<80xf32>
    %32 = vector.multi_reduction <add>, %31, %cst_22 [0] : vector<4x80xf32> to vector<80xf32>
    %33 = vector.shape_cast %32 : vector<80xf32> to vector<1x80xf32>
    %34 = math.log %33 : vector<1x80xf32>
    %35 = vector.broadcast %34 : vector<1x80xf32> to vector<4x80xf32>
    %36 = arith.subf %30, %35 : vector<4x80xf32>
    %37 = vector.broadcast %5 : vector<1x80xf32> to vector<4x80xf32>
    %38 = arith.cmpf oeq, %4, %37 : vector<4x80xf32>
    %39 = arith.extui %38 : vector<4x80xi1> to vector<4x80xi32>
    %40 = arith.sitofp %39 : vector<4x80xi32> to vector<4x80xf32>
    %41 = arith.mulf %36, %40 : vector<4x80xf32>
    %cst_23 = arith.constant dense<0.000000e+00> : vector<80xf32>
    %42 = vector.multi_reduction <add>, %41, %cst_23 [0] : vector<4x80xf32> to vector<80xf32>
    %43 = vector.shape_cast %42 : vector<80xf32> to vector<1x80xf32>
    %44 = vector.broadcast %28 : vector<1x80xf32> to vector<4x80xf32>
    %45 = arith.cmpf oeq, %26, %44 : vector<4x80xf32>
    %cst_24 = arith.constant 4.000000e+00 : f32
    %46 = vector.broadcast %cst_24 : f32 to vector<4x80xf32>
    %47 = arith.select %45, %4, %46 : vector<4x80xi1>, vector<4x80xf32>
    %cst_25 = arith.constant dense<0x7F800000> : vector<80xf32>
    %48 = vector.multi_reduction <minimumf>, %47, %cst_25 [0] : vector<4x80xf32> to vector<80xf32>
    %49 = vector.shape_cast %48 : vector<80xf32> to vector<1x80xf32>
    %50 = arith.cmpf oeq, %49, %5 : vector<1x80xf32>
    %51 = arith.extui %50 : vector<1x80xi1> to vector<1x80xi32>
    %52 = arith.sitofp %51 : vector<1x80xi32> to vector<1x80xf32>
    %cst_26 = arith.constant -0.0166666675 : f32
    %53 = vector.broadcast %cst_26 : f32 to vector<1x80xf32>
    %54 = arith.mulf %53, %43 : vector<1x80xf32>
    %cst_27 = arith.constant 0.0166666675 : f32
    %55 = vector.broadcast %cst_27 : f32 to vector<1x80xf32>
    %56 = arith.mulf %55, %52 : vector<1x80xf32>
    %57 = tpu.concatenate %54, %56 in 0 : vector<1x80xf32>, vector<1x80xf32> -> vector<2x80xf32>
    %cst_28 = arith.constant dense<0.000000e+00> : vector<2x128xf32>
    %58 = tpu.matmul %57, %6, %cst_28 {dimension_numbers = #tpu.dot_dimension_numbers<[1], [0], [0], [1], [0, 0, 1, 1], [], []>} : vector<2x80xf32>, vector<80x128xf32>, vector<2x128xf32> -> vector<2x128xf32>
    %cst_29 = arith.constant 0.000000e+00 : f32
    %59 = vector.broadcast %cst_29 : f32 to vector<6x128xf32>
    %60 = tpu.concatenate %58, %59 in 0 : vector<2x128xf32>, vector<6x128xf32> -> vector<8x128xf32>
    %c0_30 = arith.constant 0 : index
    %c0_31 = arith.constant 0 : index
    %c0_32 = arith.constant 0 : index
    %61 = vector.load %arg7[%c0_30, %c0_31, %c0_32] : memref<1x8x128xf32, #tpu.memory_space<vmem>>, vector<1x8x128xf32>
    %62 = vector.shape_cast %61 : vector<1x8x128xf32> to vector<8x128xf32>
    %63 = vector.shape_cast %60 : vector<8x128xf32> to vector<1x8x128xf32>
    tpu.vector_store %arg7[%c0_30, %c0_31, %c0_32], %63 {strides = array<i32>} : memref<1x8x128xf32, #tpu.memory_space<vmem>>, vector<1x8x128xf32>,
    return
  }
}

</mosaic_0001>

<llo_original>
// kernel: tpu_custom_call.1
$region0: #{tpu_custom_call.1}
  #allocation0 [shape = 'u32[]', space=smem, size = 0x4, offset = 0x4, fixed_abs, tag = 'smem constant byte address 0x4 - core index']
  #allocation1 [shape = 'u32[144,128]{1,0:T(1,128)}', space=vmem, size = 0x12000, scoped, tag = 'internal scratch']
  %s0 = inlined_call_operand.hbm [shape: f32[80,256], index: 0, kind: input, shape index: {}]
  %s1 = inlined_call_operand.hbm [shape: f32[256,128], index: 1, kind: input, shape index: {}]
  %s2 = inlined_call_operand.vmem [shape: f32[1,128], index: 2, kind: input, shape index: {}]
  %s3 = inlined_call_operand.vmem [shape: f32[4,80], index: 3, kind: input, shape index: {}]
  %s4 = inlined_call_operand.hbm [shape: f32[4,80], index: 4, kind: input, shape index: {}]
  %s5 = inlined_call_operand.vmem [shape: f32[1,80], index: 5, kind: input, shape index: {}]
  %s6 = inlined_call_operand.hbm [shape: f32[80,128], index: 6, kind: input, shape index: {}]
  %s7 = inlined_call_operand.hbm [shape: f32[1,8,128], index: 7, kind: output, shape index: {}]
  %s8 = sld [smem:[#allocation0]]
  $region54: #{tpu_custom_call.1} parent=0
    _
  %s10 = ssub.s32 1, %s8
  %s11 = scalar_select 0, %s10, %s8
  $region1: #{tpu_custom_call.1} parent=0
    #allocation2 [shape = 'u8[81920]{0}', space=vmem, size = 0x14000, scoped, tag = 'input window, operand 0, single buffered']
    #allocation3 [shape = 's32[1]{0}', space=sflag, size = 0x4, scoped, tag = 'scoped memory for tpu_custom_call.1']
    #allocation4 [shape = 's32[1]{0}', space=sflag, size = 0x4, scoped, tag = 'scoped memory for tpu_custom_call.1']
    #allocation5 [shape = 'u8[131072]{0}', space=vmem, size = 0x20000, scoped, tag = 'input window, operand 1, single buffered']
    #allocation6 [shape = 's32[1]{0}', space=sflag, size = 0x4, scoped, tag = 'scoped memory for tpu_custom_call.1']
    #allocation7 [shape = 'u8[2048]{0}', space=vmem, size = 0x800, scoped, tag = 'input window, operand 4, single buffered']
    #allocation8 [shape = 'u8[40960]{0}', space=vmem, size = 0xa000, scoped, tag = 'input window, operand 6, single buffered']
    #allocation9 [shape = 's32[1]{0}', space=sflag, size = 0x4, scoped, tag = 'scoped memory for tpu_custom_call.1']
    #allocation10 [shape = 'u8[4096]{0}', space=vmem, size = 0x1000, scoped, tag = 'output window, operand 0, single buffered']
    %12 = vsyncpa [#allocation3], 0
    %13 = vsyncpa [#allocation6], 0
    %14 = vsyncpa [#allocation9], 0
    %15 = vsyncpa [#allocation4], 0
    // Predicated region
    $region2: #{tpu_custom_call.1} parent=1 // pred_check
      _
    $region3: #{tpu_custom_call.1} parent=1 // pred_check_branch
      %17 = sbr.rel (0) target = $region5
    $region4: #{tpu_custom_call.1} parent=1 // pred_region
      %s19 = ssub.s32 2560, 2560
      %20 = vsyncadd [#allocation3], %s19
      %s21 = sshll.u32 [#allocation2], 4
      %s22 = int_to_ptr.vmem [resolvable:$true] %s21
      %27 = dma.hbm_to_vmem [thread:$0]  %s0, 2560, %s22, [#allocation3], 256, 256, 16
    $region5: #{tpu_custom_call.1} parent=1 // pred_fallthru
      _
    // Predicated region
    $region6: #{tpu_custom_call.1} parent=1 // pred_check
      _
    $region7: #{tpu_custom_call.1} parent=1 // pred_check_branch
      %29 = sbr.rel (0) target = $region9
    $region8: #{tpu_custom_call.1} parent=1 // pred_region
      %s31 = ssub.s32 4096, 4096
      %32 = vsyncadd [#allocation6], %s31
      %s33 = sshll.u32 [#allocation5], 4
      %s34 = int_to_ptr.vmem [resolvable:$true] %s33
      %39 = dma.hbm_to_vmem [thread:$0]  %s1, 4096, %s34, [#allocation6], 128, 128, 8
    $region9: #{tpu_custom_call.1} parent=1 // pred_fallthru
      _
    // Predicated region
    $region10: #{tpu_custom_call.1} parent=1 // pred_check
      _
    $region11: #{tpu_custom_call.1} parent=1 // pred_check_branch
      %41 = sbr.rel (0) target = $region13
    $region12: #{tpu_custom_call.1} parent=1 // pred_region
      _
    $region13: #{tpu_custom_call.1} parent=1 // pred_fallthru
      _
    // Predicated region
    $region14: #{tpu_custom_call.1} parent=1 // pred_check
      _
    $region15: #{tpu_custom_call.1} parent=1 // pred_check_branch
      %43 = sbr.rel (0) target = $region17
    $region16: #{tpu_custom_call.1} parent=1 // pred_region
      _
    $region17: #{tpu_custom_call.1} parent=1 // pred_fallthru
      _
    // Predicated region
    $region18: #{tpu_custom_call.1} parent=1 // pred_check
      _
    $region19: #{tpu_custom_call.1} parent=1 // pred_check_branch
      %45 = sbr.rel (0) target = $region21
    $region20: #{tpu_custom_call.1} parent=1 // pred_region
      %s47 = ssub.s32 64, 64
      %48 = vsyncadd [#allocation6], %s47
      %s50 = sshll.u32 [#allocation7], 4
      %s51 = int_to_ptr.vmem [resolvable:$true] %s50
      %53 = dma.hbm_to_vmem [thread:$0]  %s4, 64, %s51, [#allocation6]
    $region21: #{tpu_custom_call.1} parent=1 // pred_fallthru
      _
    // Predicated region
    $region22: #{tpu_custom_call.1} parent=1 // pred_check
      _
    $region23: #{tpu_custom_call.1} parent=1 // pred_check_branch
      %55 = sbr.rel (0) target = $region25
    $region24: #{tpu_custom_call.1} parent=1 // pred_region
      _
    $region25: #{tpu_custom_call.1} parent=1 // pred_fallthru
      _
    // Predicated region
    $region26: #{tpu_custom_call.1} parent=1 // pred_check
      _
    $region27: #{tpu_custom_call.1} parent=1 // pred_check_branch
      %57 = sbr.rel (0) target = $region29
    $region28: #{tpu_custom_call.1} parent=1 // pred_region
      %s59 = ssub.s32 1280, 1280
      %60 = vsyncadd [#allocation9], %s59
      %s61 = sshll.u32 [#allocation8], 4
      %s62 = int_to_ptr.vmem [resolvable:$true] %s61
      %67 = dma.hbm_to_vmem [thread:$0]  %s6, 1280, %s62, [#allocation9], 128, 128, 8
    $region29: #{tpu_custom_call.1} parent=1 // pred_fallthru
      _
    // Predicated region
    $region30: #{tpu_custom_call.1} parent=1 // pred_check
      _
    $region31: #{tpu_custom_call.1} parent=1 // pred_check_branch
      %69 = sbr.rel (0) target = $region33
    $region32: #{tpu_custom_call.1} parent=1 // pred_region
      %70 = dma.done [#allocation3], 2560
    $region33: #{tpu_custom_call.1} parent=1 // pred_fallthru
      _
    // Predicated region
    $region34: #{tpu_custom_call.1} parent=1 // pred_check
      _
    $region35: #{tpu_custom_call.1} parent=1 // pred_check_branch
      %72 = sbr.rel (0) target = $region37
    $region36: #{tpu_custom_call.1} parent=1 // pred_region
      %73 = dma.done [#allocation6], 4096
    $region37: #{tpu_custom_call.1} parent=1 // pred_fallthru
      _
    // Predicated region
    $region38: #{tpu_custom_call.1} parent=1 // pred_check
      _
    $region39: #{tpu_custom_call.1} parent=1 // pred_check_branch
      %75 = sbr.rel (0) target = $region41
    $region40: #{tpu_custom_call.1} parent=1 // pred_region
      %76 = dma.done [#allocation6], 64
    $region41: #{tpu_custom_call.1} parent=1 // pred_fallthru
      _
    // Predicated region
    $region42: #{tpu_custom_call.1} parent=1 // pred_check
      _
    $region43: #{tpu_custom_call.1} parent=1 // pred_check_branch
      %78 = sbr.rel (0) target = $region45
    $region44: #{tpu_custom_call.1} parent=1 // pred_region
      %79 = dma.done [#allocation9], 1280
    $region45: #{tpu_custom_call.1} parent=1 // pred_fallthru
      _
    %v80 = vld [vmem:[#allocation2] sm:$0xff]
    %v81 = vld [vmem:[#allocation2 + $0x8] sm:$0xff]
    %v82 = vld [vmem:[#allocation2 + $0x10] sm:$0xff]
    %v83 = vld [vmem:[#allocation2 + $0x18] sm:$0xff]
    %v84 = vld [vmem:[#allocation2 + $0x20] sm:$0xff]
    %v85 = vld [vmem:[#allocation2 + $0x28] sm:$0xff]
    %v86 = vld [vmem:[#allocation2 + $0x30] sm:$0xff]
    %v87 = vld [vmem:[#allocation2 + $0x38] sm:$0xff]
    %v88 = vld [vmem:[#allocation2 + $0x40] sm:$0xff]
    %v89 = vld [vmem:[#allocation2 + $0x48] sm:$0xff]
    %v90 = vld [vmem:[#allocation2 + $0x50] sm:$0xff]
    %v91 = vld [vmem:[#allocation2 + $0x58] sm:$0xff]
    %v92 = vld [vmem:[#allocation2 + $0x60] sm:$0xff]
    %v93 = vld [vmem:[#allocation2 + $0x68] sm:$0xff]
    %v94 = vld [vmem:[#allocation2 + $0x70] sm:$0xff]
    %v95 = vld [vmem:[#allocation2 + $0x78] sm:$0xff]
    %v96 = vld [vmem:[#allocation2 + $0x80] sm:$0xff]
    %v97 = vld [vmem:[#allocation2 + $0x88] sm:$0xff]
    %v98 = vld [vmem:[#allocation2 + $0x90] sm:$0xff]
    %v99 = vld [vmem:[#allocation2 + $0x98] sm:$0xff]
    %v100 = vld [vmem:[#allocation5] sm:$0xff]
    %v101 = vld [vmem:[#allocation5 + $0x8] sm:$0xff]
    %v102 = vld [vmem:[#allocation5 + $0x10] sm:$0xff]
    %v103 = vld [vmem:[#allocation5 + $0x18] sm:$0xff]
    %v104 = vld [vmem:[#allocation5 + $0x20] sm:$0xff]
    %v105 = vld [vmem:[#allocation5 + $0x28] sm:$0xff]
    %v106 = vld [vmem:[#allocation5 + $0x30] sm:$0xff]
    %v107 = vld [vmem:[#allocation5 + $0x38] sm:$0xff]
    %v108 = vld [vmem:[#allocation5 + $0x40] sm:$0xff]
    %v109 = vld [vmem:[#allocation5 + $0x48] sm:$0xff]
    %v110 = vld [vmem:[#allocation5 + $0x50] sm:$0xff]
    %v111 = vld [vmem:[#allocation5 + $0x58] sm:$0xff]
    %v112 = vld [vmem:[#allocation5 + $0x60] sm:$0xff]
    %v113 = vld [vmem:[#allocation5 + $0x68] sm:$0xff]
    %v114 = vld [vmem:[#allocation5 + $0x70] sm:$0xff]
    %v115 = vld [vmem:[#allocation5 + $0x78] sm:$0xff]
    %v116 = vld [vmem:[#allocation5 + $0x80] sm:$0xff]
    %v117 = vld [vmem:[#allocation5 + $0x88] sm:$0xff]
    %v118 = vld [vmem:[#allocation5 + $0x90] sm:$0xff]
    %v119 = vld [vmem:[#allocation5 + $0x98] sm:$0xff]
    %v120 = vld [vmem:[#allocation5 + $0xa0] sm:$0xff]
    %v121 = vld [vmem:[#allocation5 + $0xa8] sm:$0xff]
    %v122 = vld [vmem:[#allocation5 + $0xb0] sm:$0xff]
    %v123 = vld [vmem:[#allocation5 + $0xb8] sm:$0xff]
    %v124 = vld [vmem:[#allocation5 + $0xc0] sm:$0xff]
    %v125 = vld [vmem:[#allocation5 + $0xc8] sm:$0xff]
    %v126 = vld [vmem:[#allocation5 + $0xd0] sm:$0xff]
    %v127 = vld [vmem:[#allocation5 + $0xd8] sm:$0xff]
    %v128 = vld [vmem:[#allocation5 + $0xe0] sm:$0xff]
    %v129 = vld [vmem:[#allocation5 + $0xe8] sm:$0xff]
    %v130 = vld [vmem:[#allocation5 + $0xf0] sm:$0xff]
    %v131 = vld [vmem:[#allocation5 + $0xf8] sm:$0xff]
    %v132 = vld [vmem:[%s2] sm:$0x1]
    %v133 = vld [vmem:[%s3] sm:$0xf]
    %v134 = vld [vmem:[#allocation7] sm:$0xf]
    %v135 = vld [vmem:[%s5] sm:$0x1]
    %v136 = vld [vmem:[#allocation8] sm:$0xff]
    %v137 = vld [vmem:[#allocation8 + $0x8] sm:$0xff]
    %v138 = vld [vmem:[#allocation8 + $0x10] sm:$0xff]
    %v139 = vld [vmem:[#allocation8 + $0x18] sm:$0xff]
    %v140 = vld [vmem:[#allocation8 + $0x20] sm:$0xff]
    %v141 = vld [vmem:[#allocation8 + $0x28] sm:$0xff]
    %v142 = vld [vmem:[#allocation8 + $0x30] sm:$0xff]
    %v143 = vld [vmem:[#allocation8 + $0x38] sm:$0xff]
    %v144 = vld [vmem:[#allocation8 + $0x40] sm:$0xff]
    %v145 = vld [vmem:[#allocation8 + $0x48] sm:$0xff]
    %v147 = vlaneseq
    %v148 = vshrl.u32 %v147, 7
    %v149 = vsub.s32 0, %v148
    %v150 = vrot.slane %v132, %v149
    %152 = vmatprep.subr.mxu0 0.0
    %153 = vmatpush1.msra.mxu0 %v115
    %154 = vmatprep.subr.mxu0 0.0
    %155 = vmatpush1.msra.mxu0 %v114
    %156 = vmatprep.subr.mxu0 0.0
    %157 = vmatpush1.msra.mxu0 %v113
    %158 = vmatprep.subr.mxu0 0.0
    %159 = vmatpush1.msra.mxu0 %v112
    %160 = vmatprep.subr.mxu0 0.0
    %161 = vmatpush1.msra.mxu0 %v111
    %162 = vmatprep.subr.mxu0 0.0
    %163 = vmatpush1.msra.mxu0 %v110
    %164 = vmatprep.subr.mxu0 0.0
    %165 = vmatpush1.msra.mxu0 %v109
    %166 = vmatprep.subr.mxu0 0.0
    %167 = vmatpush1.msra.mxu0 %v108
    %168 = vmatprep.subr.mxu0 0.0
    %169 = vmatpush1.msra.mxu0 %v107
    %170 = vmatprep.subr.mxu0 0.0
    %171 = vmatpush1.msra.mxu0 %v106
    %172 = vmatprep.subr.mxu0 0.0
    %173 = vmatpush1.msra.mxu0 %v105
    %174 = vmatprep.subr.mxu0 0.0
    %175 = vmatpush1.msra.mxu0 %v104
    %176 = vmatprep.subr.mxu0 0.0
    %177 = vmatpush1.msra.mxu0 %v103
    %178 = vmatprep.subr.mxu0 0.0
    %179 = vmatpush1.msra.mxu0 %v102
    %180 = vmatprep.subr.mxu0 0.0
    %181 = vmatpush1.msra.mxu0 %v101
    %182 = vmatprep.subr.mxu0 0.0
    %183 = vmatpush1.msra.mxu0 %v100
    %184 = vmatprep.subr.mxu0 0.0
    %185 = vmatpush2.msra.mxu0 %v131
    %186 = vmatprep.subr.mxu0 0.0
    %187 = vmatpush2.msra.mxu0 %v130
    %188 = vmatprep.subr.mxu0 0.0
    %189 = vmatpush2.msra.mxu0 %v129
    %190 = vmatprep.subr.mxu0 0.0
    %191 = vmatpush2.msra.mxu0 %v128
    %192 = vmatprep.subr.mxu0 0.0
    %193 = vmatpush2.msra.mxu0 %v127
    %194 = vmatprep.subr.mxu0 0.0
    %195 = vmatpush2.msra.mxu0 %v126
    %196 = vmatprep.subr.mxu0 0.0
    %197 = vmatpush2.msra.mxu0 %v125
    %198 = vmatprep.subr.mxu0 0.0
    %199 = vmatpush2.msra.mxu0 %v124
    %200 = vmatprep.subr.mxu0 0.0
    %201 = vmatpush2.msra.mxu0 %v123
    %202 = vmatprep.subr.mxu0 0.0
    %203 = vmatpush2.msra.mxu0 %v122
    %204 = vmatprep.subr.mxu0 0.0
    %205 = vmatpush2.msra.mxu0 %v121
    %206 = vmatprep.subr.mxu0 0.0
    %207 = vmatpush2.msra.mxu0 %v120
    %208 = vmatprep.subr.mxu0 0.0
    %209 = vmatpush2.msra.mxu0 %v119
    %210 = vmatprep.subr.mxu0 0.0
    %211 = vmatpush2.msra.mxu0 %v118
    %212 = vmatprep.subr.mxu0 0.0
    %213 = vmatpush2.msra.mxu0 %v117
    %214 = vmatprep.subr.mxu0 0.0
    %215 = vmatpush2.msra.mxu0 %v116
    %216 = vmatprep.mubr.f32.mxu0 %v81
    %217 = vmatmul.mubr.f32.gmra.mxu0 %v80
    %v218 = vpop.f32.mrf.mxu0
    %v219 = vadd.f32 %v150, %v218
    %v220 = vpop.f32.mrf.mxu0
    %221 = vmatprep.mubr.f32.mxu0 %v83
    %222 = vmatmul.mubr.f32.gmra.mxu0 %v82
    %v223 = vpop.f32.mrf.mxu0
    %v224 = vadd.f32 %v150, %v223
    %v225 = vpop.f32.mrf.mxu0
    %226 = vmatprep.mubr.f32.mxu0 %v85
    %227 = vmatmul.mubr.f32.gmra.mxu0 %v84
    %v228 = vpop.f32.mrf.mxu0
    %v229 = vadd.f32 %v150, %v228
    %v230 = vpop.f32.mrf.mxu0
    %231 = vmatprep.mubr.f32.mxu0 %v87
    %232 = vmatmul.mubr.f32.gmra.mxu0 %v86
    %v233 = vpop.f32.mrf.mxu0
    %v234 = vadd.f32 %v150, %v233
    %v235 = vpop.f32.mrf.mxu0
    %236 = vmatprep.mubr.f32.mxu0 %v89
    %237 = vmatmul.mubr.f32.gmra.mxu0 %v88
    %v238 = vpop.f32.mrf.mxu0
    %v239 = vadd.f32 %v150, %v238
    %v240 = vpop.f32.mrf.mxu0
    %241 = vmatprep.mubr.f32.mxu0 %v91
    %242 = vmatmul.mubr.f32.gmra.mxu0 %v90
    %v243 = vpop.f32.mrf.mxu0
    %v244 = vadd.f32 %v150, %v243
    %v245 = vpop.f32.mrf.mxu0
    %246 = vmatprep.mubr.f32.mxu0 %v93
    %247 = vmatmul.mubr.f32.gmra.mxu0 %v92
    %v248 = vpop.f32.mrf.mxu0
    %v249 = vadd.f32 %v150, %v248
    %v250 = vpop.f32.mrf.mxu0
    %251 = vmatprep.mubr.f32.mxu0 %v95
    %252 = vmatmul.mubr.f32.gmra.mxu0 %v94
    %v253 = vpop.f32.mrf.mxu0
    %v254 = vadd.f32 %v150, %v253
    %v255 = vpop.f32.mrf.mxu0
    %256 = vmatprep.mubr.f32.mxu0 %v97
    %257 = vmatmul.mubr.f32.gmra.mxu0 %v96
    %v258 = vpop.f32.mrf.mxu0
    %v259 = vadd.f32 %v150, %v258
    %v260 = vpop.f32.mrf.mxu0
    %261 = vmatprep.mubr.f32.mxu0 %v99
    %262 = vmatmul.mubr.f32.gmra.mxu0 %v98
    %v263 = vpop.f32.mrf.mxu0
    %v264 = vadd.f32 %v150, %v263
    %v265 = vpop.f32.mrf.mxu0
    %266 = vdwg.mxu0
    %v267 = vmax.f32 %v219, 0.0
    %v268 = vmax.f32 %v224, 0.0
    %v269 = vmax.f32 %v229, 0.0
    %v270 = vmax.f32 %v234, 0.0
    %v271 = vmax.f32 %v239, 0.0
    %v272 = vmax.f32 %v244, 0.0
    %v273 = vmax.f32 %v249, 0.0
    %v274 = vmax.f32 %v254, 0.0
    %v275 = vmax.f32 %v259, 0.0
    %v276 = vmax.f32 %v264, 0.0
    %vm277 = vcmask 654336
    %v279 = vsel %vm277, %v133, 0
    %281 = vmatprep.subr.mxu0 0.0
    %282 = vmatpush1.msra.mxu0 0.0
    %283 = vmatprep.subr.mxu0 0.0
    %284 = vmatpush1.msra.mxu0 0.0
    %285 = vmatprep.subr.mxu0 0.0
    %286 = vmatpush1.msra.mxu0 0.0
    %287 = vmatprep.subr.mxu0 0.0
    %288 = vmatpush1.msra.mxu0 0.0
    %289 = vmatprep.subr.mxu0 0.0
    %290 = vmatpush1.msra.mxu0 0.0
    %291 = vmatprep.subr.mxu0 0.0
    %292 = vmatpush1.msra.mxu0 0.0
    %293 = vmatprep.subr.mxu0 0.0
    %294 = vmatpush1.msra.mxu0 %v276
    %295 = vmatprep.subr.mxu0 0.0
    %296 = vmatpush1.msra.mxu0 %v275
    %297 = vmatprep.subr.mxu0 0.0
    %298 = vmatpush1.msra.mxu0 %v274
    %299 = vmatprep.subr.mxu0 0.0
    %300 = vmatpush1.msra.mxu0 %v273
    %301 = vmatprep.subr.mxu0 0.0
    %302 = vmatpush1.msra.mxu0 %v272
    %303 = vmatprep.subr.mxu0 0.0
    %304 = vmatpush1.msra.mxu0 %v271
    %305 = vmatprep.subr.mxu0 0.0
    %306 = vmatpush1.msra.mxu0 %v270
    %307 = vmatprep.subr.mxu0 0.0
    %308 = vmatpush1.msra.mxu0 %v269
    %309 = vmatprep.subr.mxu0 0.0
    %310 = vmatpush1.msra.mxu0 %v268
    %311 = vmatprep.subr.mxu0 0.0
    %312 = vmatpush1.msra.mxu0 %v267
    %313 = vmatprep.subr.mxu0 0.0
    %314 = vmatpush2.msra.mxu0 0.0
    %315 = vmatprep.subr.mxu0 0.0
    %316 = vmatpush2.msra.mxu0 0.0
    %317 = vmatprep.subr.mxu0 0.0
    %318 = vmatpush2.msra.mxu0 0.0
    %319 = vmatprep.subr.mxu0 0.0
    %320 = vmatpush2.msra.mxu0 0.0
    %321 = vmatprep.subr.mxu0 0.0
    %322 = vmatpush2.msra.mxu0 0.0
    %323 = vmatprep.subr.mxu0 0.0
    %324 = vmatpush2.msra.mxu0 0.0
    %325 = vmatprep.subr.mxu0 0.0
    %326 = vmatpush2.msra.mxu0 0.0
    %327 = vmatprep.subr.mxu0 0.0
    %328 = vmatpush2.msra.mxu0 0.0
    %329 = vmatprep.subr.mxu0 0.0
    %330 = vmatpush2.msra.mxu0 0.0
    %331 = vmatprep.subr.mxu0 0.0
    %332 = vmatpush2.msra.mxu0 0.0
    %333 = vmatprep.subr.mxu0 0.0
    %334 = vmatpush2.msra.mxu0 0.0
    %335 = vmatprep.subr.mxu0 0.0
    %336 = vmatpush2.msra.mxu0 0.0
    %337 = vmatprep.subr.mxu0 0.0
    %338 = vmatpush2.msra.mxu0 0.0
    %339 = vmatprep.subr.mxu0 0.0
    %340 = vmatpush2.msra.mxu0 0.0
    %341 = vmatprep.subr.mxu0 0.0
    %342 = vmatpush2.msra.mxu0 0.0
    %343 = vmatprep.subr.mxu0 0.0
    %344 = vmatpush2.msra.mxu0 0.0
    %345 = vmatprep.mubr.f32.mxu0 0.0
    %346 = vmatmul.mubr.f32.gmra.mxu0 %v279
    %v347 = vpop.f32.mrf.mxu0
    %v348 = vadd.f32 0.0, %v347
    %v349 = vpop.f32.mrf.mxu0
    %350 = vdwg.mxu0
    %351 = vmatprep.subr.mxu0 0.0
    %352 = vmatpush1.xpose.msra.mxu0 0.0
    %353 = vmatprep.subr.mxu0 0.0
    %354 = vmatpush1.xpose.msra.mxu0 0.0
    %355 = vmatprep.subr.mxu0 0.0
    %356 = vmatpush1.xpose.msra.mxu0 0.0
    %357 = vmatprep.subr.mxu0 0.0
    %358 = vmatpush1.xpose.msra.mxu0 0.0
    %359 = vmatprep.subr.mxu0 0.0
    %360 = vmatpush1.xpose.msra.mxu0 0.0
    %361 = vmatprep.subr.mxu0 0.0
    %362 = vmatpush1.xpose.msra.mxu0 0.0
    %363 = vmatprep.subr.mxu0 0.0
    %364 = vmatpush1.xpose.msra.mxu0 %v276
    %365 = vmatprep.subr.mxu0 0.0
    %366 = vmatpush1.xpose.msra.mxu0 %v275
    %367 = vmatprep.subr.mxu0 0.0
    %368 = vmatpush1.xpose.msra.mxu0 %v274
    %369 = vmatprep.subr.mxu0 0.0
    %370 = vmatpush1.xpose.msra.mxu0 %v273
    %371 = vmatprep.subr.mxu0 0.0
    %372 = vmatpush1.xpose.msra.mxu0 %v272
    %373 = vmatprep.subr.mxu0 0.0
    %374 = vmatpush1.xpose.msra.mxu0 %v271
    %375 = vmatprep.subr.mxu0 0.0
    %376 = vmatpush1.xpose.msra.mxu0 %v270
    %377 = vmatprep.subr.mxu0 0.0
    %378 = vmatpush1.xpose.msra.mxu0 %v269
    %379 = vmatprep.subr.mxu0 0.0
    %380 = vmatpush1.xpose.msra.mxu0 %v268
    %381 = vmatprep.subr.mxu0 0.0
    %382 = vmatpush1.xpose.msra.mxu0 %v267
    %383 = vmatprep.subr.mxu0 0.0
    %384 = vmatpush2.xpose.msra.mxu0 0.0
    %385 = vmatprep.subr.mxu0 0.0
    %386 = vmatpush2.xpose.msra.mxu0 0.0
    %387 = vmatprep.subr.mxu0 0.0
    %388 = vmatpush2.xpose.msra.mxu0 0.0
    %389 = vmatprep.subr.mxu0 0.0
    %390 = vmatpush2.xpose.msra.mxu0 0.0
    %391 = vmatprep.subr.mxu0 0.0
    %392 = vmatpush2.xpose.msra.mxu0 0.0
    %393 = vmatprep.subr.mxu0 0.0
    %394 = vmatpush2.xpose.msra.mxu0 0.0
    %395 = vmatprep.subr.mxu0 0.0
    %396 = vmatpush2.xpose.msra.mxu0 0.0
    %397 = vmatprep.subr.mxu0 0.0
    %398 = vmatpush2.xpose.msra.mxu0 0.0
    %399 = vmatprep.subr.mxu0 0.0
    %400 = vmatpush2.xpose.msra.mxu0 0.0
    %401 = vmatprep.subr.mxu0 0.0
    %402 = vmatpush2.xpose.msra.mxu0 0.0
    %403 = vmatprep.subr.mxu0 0.0
    %404 = vmatpush2.xpose.msra.mxu0 0.0
    %405 = vmatprep.subr.mxu0 0.0
    %406 = vmatpush2.xpose.msra.mxu0 0.0
    %407 = vmatprep.subr.mxu0 0.0
    %408 = vmatpush2.xpose.msra.mxu0 0.0
    %409 = vmatprep.subr.mxu0 0.0
    %410 = vmatpush2.xpose.msra.mxu0 0.0
    %411 = vmatprep.subr.mxu0 0.0
    %412 = vmatpush2.xpose.msra.mxu0 0.0
    %413 = vmatprep.subr.mxu0 0.0
    %414 = vmatpush2.xpose.msra.mxu0 0.0
    %415 = vmatprep.mubr.f32.mxu0 0.0
    %416 = vmatmul.mubr.f32.gmra.mxu0 %v348
    %v417 = vpop.f32.mrf.mxu0
    %v418 = vadd.f32 0.0, %v417
    %v419 = vpop.f32.mrf.mxu0
    %420 = vdwg.mxu0
    %v421 = vmul.f32 %v348, %v348
    %vm422 = vcmask 1043456
    %v423 = vsel %vm422, %v421, 0.0
    %424 = vadd.xlane.f32.xlu0 %v423
    %v425 = vpop.xlane.xlu0 %424
    %vm426 = vcmp.lt.f32.partialorder %v134, 4.0
    %v427 = vsel %vm426, 0.0, -1e+30
    %v428 = vmul.f32 %v418, 2.0
    %v429 = vsub.f32 %v428, %v425
    %v430 = vadd.f32 %v429, %v427
    %vm431 = vcmask 650240
    %v432 = vsel %vm431, %v430, -inf
    %v433 = vrot.slane %v432, 4
    %v434 = vmax.f32 %v432, %v433
    %v435 = vrot.slane %v434, 2
    %v436 = vmax.f32 %v434, %v435
    %v437 = vrot.slane %v436, 1
    %v438 = vmax.f32 %v436, %v437
    %v439 = vsub.f32 %v430, %v438
    %v440 = vmul.f32 %v439, 1.442695
    %v441 = vpow.pop %v440
    %v442 = vsel %vm431, %v441, 0.0
    %v443 = vrot.slane %v442, 4
    %v444 = vadd.f32 %v442, %v443
    %v445 = vrot.slane %v444, 2
    %v446 = vadd.f32 %v444, %v445
    %v447 = vrot.slane %v446, 1
    %v448 = vadd.f32 %v446, %v447
    %v449 = vlog2.pop %v448
    %v450 = vmul.f32 %v449, 0.6931472
    %v451 = vsub.f32 %v439, %v450
    %v453 = vlaneseq
    %v454 = vshrl.u32 %v453, 7
    %v455 = vsub.s32 0, %v454
    %v456 = vrot.slane %v135, %v455
    %vm458 = vcmp.eq.f32.partialorder %v134, %v456
    %v459 = vsel %vm458, 1, 0
    %v460 = vcvt.s32.f32 %v459
    %v461 = vmul.f32 %v451, %v460
    %v462 = vsel %vm431, %v461, 0.0
    %v463 = vrot.slane %v462, 4
    %v464 = vadd.f32 %v462, %v463
    %v465 = vrot.slane %v464, 2
    %v466 = vadd.f32 %v464, %v465
    %v467 = vrot.slane %v466, 1
    %v468 = vadd.f32 %v466, %v467
    %vm469 = vcmp.eq.f32.partialorder %v430, %v438
    %v470 = vsel %vm469, %v134, 4.0
    %v471 = vsel %vm431, %v470, inf
    %v472 = vrot.slane %v471, 4
    %v473 = vmin.f32 %v471, %v472
    %v474 = vrot.slane %v473, 2
    %v475 = vmin.f32 %v473, %v474
    %v476 = vrot.slane %v475, 1
    %v477 = vmin.f32 %v475, %v476
    %vm478 = vcmp.eq.f32.partialorder %v477, %v135
    %v479 = vsel %vm478, 1, 0
    %v480 = vcvt.s32.f32 %v479
    %v481 = vmul.f32 %v468, -0.016666668
    %v482 = vmul.f32 %v480, 0.016666668
    %v484 = vrot.slane %v482, 7
    %vm486 = vcmask 1040384
    %v487 = vsel %vm486, %v481, %v484
    %v489 = vsel %vm277, %v487, 0
    %491 = vmatprep.subr.mxu0 0.0
    %492 = vmatpush1.msra.mxu0 0.0
    %493 = vmatprep.subr.mxu0 0.0
    %494 = vmatpush1.msra.mxu0 0.0
    %495 = vmatprep.subr.mxu0 0.0
    %496 = vmatpush1.msra.mxu0 0.0
    %497 = vmatprep.subr.mxu0 0.0
    %498 = vmatpush1.msra.mxu0 0.0
    %499 = vmatprep.subr.mxu0 0.0
    %500 = vmatpush1.msra.mxu0 0.0
    %501 = vmatprep.subr.mxu0 0.0
    %502 = vmatpush1.msra.mxu0 0.0
    %503 = vmatprep.subr.mxu0 0.0
    %504 = vmatpush1.msra.mxu0 %v145
    %505 = vmatprep.subr.mxu0 0.0
    %506 = vmatpush1.msra.mxu0 %v144
    %507 = vmatprep.subr.mxu0 0.0
    %508 = vmatpush1.msra.mxu0 %v143
    %509 = vmatprep.subr.mxu0 0.0
    %510 = vmatpush1.msra.mxu0 %v142
    %511 = vmatprep.subr.mxu0 0.0
    %512 = vmatpush1.msra.mxu0 %v141
    %513 = vmatprep.subr.mxu0 0.0
    %514 = vmatpush1.msra.mxu0 %v140
    %515 = vmatprep.subr.mxu0 0.0
    %516 = vmatpush1.msra.mxu0 %v139
    %517 = vmatprep.subr.mxu0 0.0
    %518 = vmatpush1.msra.mxu0 %v138
    %519 = vmatprep.subr.mxu0 0.0
    %520 = vmatpush1.msra.mxu0 %v137
    %521 = vmatprep.subr.mxu0 0.0
    %522 = vmatpush1.msra.mxu0 %v136
    %523 = vmatprep.subr.mxu0 0.0
    %524 = vmatpush2.msra.mxu0 0.0
    %525 = vmatprep.subr.mxu0 0.0
    %526 = vmatpush2.msra.mxu0 0.0
    %527 = vmatprep.subr.mxu0 0.0
    %528 = vmatpush2.msra.mxu0 0.0
    %529 = vmatprep.subr.mxu0 0.0
    %530 = vmatpush2.msra.mxu0 0.0
    %531 = vmatprep.subr.mxu0 0.0
    %532 = vmatpush2.msra.mxu0 0.0
    %533 = vmatprep.subr.mxu0 0.0
    %534 = vmatpush2.msra.mxu0 0.0
    %535 = vmatprep.subr.mxu0 0.0
    %536 = vmatpush2.msra.mxu0 0.0
    %537 = vmatprep.subr.mxu0 0.0
    %538 = vmatpush2.msra.mxu0 0.0
    %539 = vmatprep.subr.mxu0 0.0
    %540 = vmatpush2.msra.mxu0 0.0
    %541 = vmatprep.subr.mxu0 0.0
    %542 = vmatpush2.msra.mxu0 0.0
    %543 = vmatprep.subr.mxu0 0.0
    %544 = vmatpush2.msra.mxu0 0.0
    %545 = vmatprep.subr.mxu0 0.0
    %546 = vmatpush2.msra.mxu0 0.0
    %547 = vmatprep.subr.mxu0 0.0
    %548 = vmatpush2.msra.mxu0 0.0
    %549 = vmatprep.subr.mxu0 0.0
    %550 = vmatpush2.msra.mxu0 0.0
    %551 = vmatprep.subr.mxu0 0.0
    %552 = vmatpush2.msra.mxu0 0.0
    %553 = vmatprep.subr.mxu0 0.0
    %554 = vmatpush2.msra.mxu0 0.0
    %555 = vmatprep.mubr.f32.mxu0 0.0
    %556 = vmatmul.mubr.f32.gmra.mxu0 %v489
    %v557 = vpop.f32.mrf.mxu0
    %v558 = vadd.f32 0.0, %v557
    %v559 = vpop.f32.mrf.mxu0
    %560 = vdwg.mxu0
    %vm561 = vcmask 1041408
    %v562 = vsel %vm561, %v558, 0.0
    %563 = vst [vmem:[#allocation10] sm:$0xff] %v562
    // Predicated region
    $region46: #{tpu_custom_call.1} parent=1 // pred_check
      _
    $region47: #{tpu_custom_call.1} parent=1 // pred_check_branch
      %565 = sbr.rel (0) target = $region49
    $region48: #{tpu_custom_call.1} parent=1 // pred_region
      %s567 = ssub.s32 128, 128
      %568 = vsyncadd [#allocation4], %s567
      %s570 = sshll.u32 [#allocation10], 4
      %s571 = int_to_ptr.vmem [resolvable:$true] %s570
      %573 = dma.vmem_to_hbm [thread:$0]  %s571, 128, %s7, [#allocation4]
    $region49: #{tpu_custom_call.1} parent=1 // pred_fallthru
      _
    // Predicated region
    $region50: #{tpu_custom_call.1} parent=1 // pred_check
      _
    $region51: #{tpu_custom_call.1} parent=1 // pred_check_branch
      %575 = sbr.rel (0) target = $region53
    $region52: #{tpu_custom_call.1} parent=1 // pred_region
      %576 = dma.done [#allocation4], 128
    $region53: #{tpu_custom_call.1} parent=1 // pred_fallthru
      _
    %577 = vsyncpa [#allocation3], 1
    %578 = vsyncpa [#allocation6], 1
    %579 = vsyncpa [#allocation9], 1
    %580 = vsyncpa [#allocation4], 1

</llo_original>
